<compile_context>
chip_gen: v5e
topology: v5e:2x2
jax: 0.10.0
libtpu: 0.0.40
codegen_flags: <defaults>
</compile_context>

<pallas_src>
import functools

import jax
import jax.numpy as jnp
from jax.experimental import pallas as pl
from jax.experimental.pallas import tpu as pltpu

_LANES = 128
_SUBLANES = 8
_NUM_PARTS = 2                            # leading "parallel" grid axis (v7x: 2 TCs)
_TILE_BYTES_PER_INPUT = 4 * 1024 * 1024   # ~4 MiB per input tile
_VMEM_LIMIT_BYTES = 40 * 1024 * 1024      # fits v5e/v6e (128 MiB) and v7x (64 MiB)


def _round_up(x: int, m: int) -> int:
    return ((x + m - 1) // m) * m


def _fold(x):
    # (block_rows, 128) f32 -> (8, 128) partial sums.  Sublane-major split is
    # layout-preserving; this is VPU adds only and hides under the HBM DMA.
    return jnp.sum(x.reshape(-1, _SUBLANES, _LANES), axis=0)


def _l1_partial_kernel(o_ref, t_ref, out_ref, *, rows, block_rows,
                       tiles_per_part, mask_from, emit_unmasked, emit_masked):
    """Accumulate sum(|o - t|) into a per-part resident (8,128) output block."""
    c = pl.program_id(0)   # part (TensorCore on v7x)
    i = pl.program_id(1)   # reduction step within the part

    @pl.when(i == 0)
    def _():
        out_ref[...] = jnp.zeros_like(out_ref)

    diff = jnp.abs(o_ref[...].astype(jnp.float32) - t_ref[...].astype(jnp.float32))
    tile = c * tiles_per_part + i          # un-clamped global tile index

    def _unmasked_update():
        out_ref[...] += _fold(diff)

    def _masked_update():
        # Covers both the ragged last tile and fully out-of-range duplicate
        # tiles (uneven core split): row_idx >= rows zeroes the contribution.
        # jnp.where (select) is used, never multiply-by-0, so padded/undefined
        # data (incl. NaN/Inf) from past the array end cannot propagate.
        row_idx = tile * block_rows + jax.lax.broadcasted_iota(
            jnp.int32, diff.shape, 0)
        out_ref[...] += _fold(jnp.where(row_idx < rows, diff, 0.0))

    if emit_masked and emit_unmasked:
        pl.when(tile < mask_from)(_unmasked_update)
        pl.when(tile >= mask_from)(_masked_update)
    elif emit_masked:
        _masked_update()
    else:
        _unmasked_update()


def l1_loss(output: jax.Array, target: jax.Array, *,
            max_block_rows: int | None = None) -> jax.Array:
    """Pallas TPU implementation of torch.nn.functional.l1_loss (mean)."""
    assert output.shape == target.shape, "output/target shape mismatch"
    total = int(output.size)
    if total == 0:
        return jnp.array(jnp.nan, dtype=output.dtype)

    o_flat = output.reshape(-1)
    t_flat = target.reshape(-1)

    # Only require 128-lane alignment for the kernel path; a sub-128 remainder
    # is summed in plain JAX.  Avoids a sliced HBM copy of both inputs for the
    # common case (element count a multiple of 128).
    main = (total // _LANES) * _LANES
    if main < total:
        tail_sum = jnp.sum(jnp.abs(o_flat[main:].astype(jnp.float32)
                                   - t_flat[main:].astype(jnp.float32)))
    else:
        tail_sum = jnp.float32(0.0)

    if main == 0:
        return (tail_sum / jnp.float32(total)).astype(output.dtype)

    rows = main // _LANES
    o2 = o_flat[:main].reshape(rows, _LANES)
    t2 = t_flat[:main].reshape(rows, _LANES)

    # Dtype-aware tile sizing: ~4 MiB per input tile, rows a multiple of the
    # native sublane packing (8 f32 / 16 bf16 / 32 int8-fp8).
    itemsize = jnp.dtype(output.dtype).itemsize
    row_align = _SUBLANES * max(1, 4 // itemsize)
    target_rows = max(row_align, _TILE_BYTES_PER_INPUT // (_LANES * itemsize))
    if max_block_rows is not None:                      # test hook
        target_rows = max(row_align, _round_up(max_block_rows, row_align))
    block_rows = min(target_rows, _round_up(rows, row_align))

    tiles_total = pl.cdiv(rows, block_rows)
    num_parts = min(_NUM_PARTS, tiles_total)
    tiles_per_part = pl.cdiv(tiles_total, num_parts)

    # Which tiles need the row mask: the ragged last real tile and any
    # duplicate tiles past tiles_total (uneven split).  Everything below
    # `mask_from` takes the unmasked fast path.
    ragged = (rows % block_rows) != 0
    mask_from = (tiles_total - 1) if ragged else tiles_total
    max_tile = num_parts * tiles_per_part - 1
    emit_masked = mask_from <= max_tile
    emit_unmasked = mask_from > 0

    if num_parts * tiles_per_part > tiles_total:
        # Uneven split: clamp the DMA'd block index in-bounds; the kernel's
        # un-clamped row mask zeroes the duplicated contribution.
        def in_index_map(c, i):
            return (jnp.minimum(c * tiles_per_part + i, tiles_total - 1), 0)
    else:
        def in_index_map(c, i):
            return (c * tiles_per_part + i, 0)

    kernel = functools.partial(
        _l1_partial_kernel, rows=rows, block_rows=block_rows,
        tiles_per_part=tiles_per_part, mask_from=mask_from,
        emit_unmasked=emit_unmasked, emit_masked=emit_masked)

    cost = pl.CostEstimate(
        flops=3 * main,                                   # sub + abs + add
        transcendentals=0,
        bytes_accessed=2 * main * itemsize + num_parts * _SUBLANES * _LANES * 4)

    partials = pl.pallas_call(
        kernel,
        out_shape=jax.ShapeDtypeStruct((num_parts, _SUBLANES, _LANES), jnp.float32),
        grid_spec=pltpu.PrefetchScalarGridSpec(
            num_scalar_prefetch=0,
            grid=(num_parts, tiles_per_part),
            in_specs=[
                pl.BlockSpec((block_rows, _LANES), in_index_map),
                pl.BlockSpec((block_rows, _LANES), in_index_map),
            ],
            out_specs=pl.BlockSpec((None, _SUBLANES, _LANES),
                                   lambda c, i: (c, 0, 0)),
        ),
        compiler_params=pltpu.CompilerParams(
            dimension_semantics=("parallel", "arbitrary"),
            vmem_limit_bytes=_VMEM_LIMIT_BYTES,
        ),
        cost_estimate=cost,
    )(o2, t2)

    # Single cross-lane reduce of the tiny per-part partial blocks + tail + mean.
    main_sum = jnp.sum(partials)
    return ((main_sum + tail_sum) / jnp.float32(total)).astype(output.dtype)


if __name__ == "__main__":
    key = jax.random.PRNGKey(0)
    k1, k2, k3, k4 = jax.random.split(key, 4)

    # Primary test: NCHW inputs like the PyTorch module (batch=2, channels=4, 16x16).
    output = jax.random.normal(k1, (2, 4, 16, 16), dtype=jnp.float32)
    target = jax.random.normal(k2, (2, 4, 16, 16), dtype=jnp.float32)
    loss = jax.block_until_ready(l1_loss(output, target))
    ref = jnp.mean(jnp.abs(output - target))
    assert jnp.allclose(loss, ref, rtol=1e-5, atol=1e-5), (loss, ref)

    # Ragged shape: exercises the in-kernel row mask and the plain-JAX tail.
    output2 = jax.random.normal(k3, (2, 3, 230, 231), dtype=jnp.float32)
    target2 = jax.random.normal(k4, (2, 3, 230, 231), dtype=jnp.float32)
    loss2 = jax.block_until_ready(l1_loss(output2, target2))
    ref2 = jnp.mean(jnp.abs(output2 - target2))
    assert jnp.allclose(loss2, ref2, rtol=1e-5, atol=1e-5), (loss2, ref2)

    # Small-tile override: exercises the multi-tile grid, the two-part
    # "parallel" split, both masked/unmasked branches, and the even split.
    loss3 = jax.block_until_ready(l1_loss(output2, target2, max_block_rows=256))
    assert jnp.allclose(loss3, ref2, rtol=1e-5, atol=1e-5), (loss3, ref2)

    # Uneven split: exercises the clamped index_map + duplicate-tile masking.
    loss4 = jax.block_until_ready(l1_loss(output2, target2, max_block_rows=512))
    assert jnp.allclose(loss4, ref2, rtol=1e-5, atol=1e-5), (loss4, ref2)

    print("KERNEL_OK")
</pallas_src>

<mosaic_0001>
module attributes {stable_mosaic.version = 11 : i64} {
  func.func @_l1_partial_kernel(%arg0: i32, %arg1: i32, %arg2: memref<16x128xf32, #tpu.memory_space<vmem>>, %arg3: memref<16x128xf32, #tpu.memory_space<vmem>>, %arg4: memref<1x8x128xf32, #tpu.memory_space<vmem>>) attributes {dimension_semantics = [#tpu.dimension_semantics<parallel>, #tpu.dimension_semantics<arbitrary>], iteration_bounds = array<i64: 1, 1>, scalar_prefetch = 0 : i64, scratch_operands = 0 : i64, tpu.core_type = #tpu.core_type<tc>, window_params = [{transform_indices = @transform_0, window_bounds = array<i64: 16, 128>}, {transform_indices = @transform_1, window_bounds = array<i64: 16, 128>}, {transform_indices = @transform_2, window_bounds = array<i64: 1, 8, 128>}]} {
    %c0_i32 = arith.constant 0 : i32
    %0 = arith.cmpi eq, %arg1, %c0_i32 : i32
    %1 = arith.extui %0 : i1 to i32
    %c0_i32_0 = arith.constant 0 : i32
    %2 = arith.cmpi ne, %1, %c0_i32_0 : i32
    scf.if %2 {
      %cst_10 = arith.constant 0.000000e+00 : f32
      %15 = vector.broadcast %cst_10 : f32 to vector<8x128xf32>
      %c0_11 = arith.constant 0 : index
      %c0_12 = arith.constant 0 : index
      %c0_13 = arith.constant 0 : index
      %16 = vector.load %arg4[%c0_11, %c0_12, %c0_13] : memref<1x8x128xf32, #tpu.memory_space<vmem>>, vector<1x8x128xf32>
      %17 = vector.shape_cast %16 : vector<1x8x128xf32> to vector<8x128xf32>
      %18 = vector.shape_cast %15 : vector<8x128xf32> to vector<1x8x128xf32>
      tpu.vector_store %arg4[%c0_11, %c0_12, %c0_13], %18 {strides = array<i32>} : memref<1x8x128xf32, #tpu.memory_space<vmem>>, vector<1x8x128xf32>,
    } else {
    }
    %c0 = arith.constant 0 : index
    %c0_1 = arith.constant 0 : index
    %3 = vector.load %arg2[%c0, %c0_1] : memref<16x128xf32, #tpu.memory_space<vmem>>, vector<16x128xf32>
    %c0_2 = arith.constant 0 : index
    %c0_3 = arith.constant 0 : index
    %4 = vector.load %arg3[%c0_2, %c0_3] : memref<16x128xf32, #tpu.memory_space<vmem>>, vector<16x128xf32>
    %5 = arith.subf %3, %4 : vector<16x128xf32>
    %6 = math.absf %5 : vector<16x128xf32>
    %c0_4 = arith.constant 0 : index
    %c0_5 = arith.constant 0 : index
    %c0_6 = arith.constant 0 : index
    %7 = vector.load %arg4[%c0_4, %c0_5, %c0_6] : memref<1x8x128xf32, #tpu.memory_space<vmem>>, vector<1x8x128xf32>
    %8 = vector.shape_cast %7 : vector<1x8x128xf32> to vector<8x128xf32>
    %9 = vector.shape_cast %6 : vector<16x128xf32> to vector<2x8x128xf32>
    %cst = arith.constant dense<0.000000e+00> : vector<8x128xf32>
    %10 = vector.multi_reduction <add>, %9, %cst [0] : vector<2x8x128xf32> to vector<8x128xf32>
    %11 = arith.addf %8, %10 : vector<8x128xf32>
    %c0_7 = arith.constant 0 : index
    %c0_8 = arith.constant 0 : index
    %c0_9 = arith.constant 0 : index
    %12 = vector.load %arg4[%c0_7, %c0_8, %c0_9] : memref<1x8x128xf32, #tpu.memory_space<vmem>>, vector<1x8x128xf32>
    %13 = vector.shape_cast %12 : vector<1x8x128xf32> to vector<8x128xf32>
    %14 = vector.shape_cast %11 : vector<8x128xf32> to vector<1x8x128xf32>
    tpu.vector_store %arg4[%c0_7, %c0_8, %c0_9], %14 {strides = array<i32>} : memref<1x8x128xf32, #tpu.memory_space<vmem>>, vector<1x8x128xf32>,
    return
  }
  func.func @transform_0(%arg0: i32, %arg1: i32) -> (i32, i32) {
    %c1_i32 = arith.constant 1 : i32
    %0 = arith.muli %arg0, %c1_i32 : i32
    %1 = arith.addi %0, %arg1 : i32
    %c0_i32 = arith.constant 0 : i32
    %c0_i32_0 = arith.constant 0 : i32
    return %1, %c0_i32 : i32, i32
  }
  func.func @transform_1(%arg0: i32, %arg1: i32) -> (i32, i32) {
    %c1_i32 = arith.constant 1 : i32
    %0 = arith.muli %arg0, %c1_i32 : i32
    %1 = arith.addi %0, %arg1 : i32
    %c0_i32 = arith.constant 0 : i32
    %c0_i32_0 = arith.constant 0 : i32
    return %1, %c0_i32 : i32, i32
  }
  func.func @transform_2(%arg0: i32, %arg1: i32) -> (i32, i32, i32) {
    %c0_i32 = arith.constant 0 : i32
    %c0_i32_0 = arith.constant 0 : i32
    %c0_i32_1 = arith.constant 0 : i32
    return %arg0, %c0_i32, %c0_i32_0 : i32, i32, i32
  }
}

</mosaic_0001>

<llo_original>
// kernel: tpu_custom_call.1
$region0: #{tpu_custom_call.1}
  #allocation0 [shape = 'u32[]', space=smem, size = 0x4, offset = 0x4, fixed_abs, tag = 'smem constant byte address 0x4 - core index']
  #allocation1 [shape = 'u32[72,128]{1,0:T(1,128)}', space=vmem, size = 0x9000, scoped, tag = 'internal scratch']
  %s0 = inlined_call_operand.hbm [shape: f32[16,128], index: 0, kind: input, shape index: {}]
  %s1 = inlined_call_operand.hbm [shape: f32[16,128], index: 1, kind: input, shape index: {}]
  %s2 = inlined_call_operand.hbm [shape: f32[1,8,128], index: 2, kind: output, shape index: {}]
  %s3 = sld [smem:[#allocation0]]
  $region30: #{tpu_custom_call.1} parent=0
    _
  %s5 = ssub.s32 1, %s3
  %s6 = scalar_select 0, %s5, %s3
  $region1: #{tpu_custom_call.1} parent=0
    #allocation2 [shape = 'u8[8192]{0}', space=vmem, size = 0x2000, scoped, tag = 'input window, operand 0, single buffered']
    #allocation3 [shape = 's32[1]{0}', space=sflag, size = 0x4, scoped, tag = 'scoped memory for tpu_custom_call.1']
    #allocation4 [shape = 's32[1]{0}', space=sflag, size = 0x4, scoped, tag = 'scoped memory for tpu_custom_call.1']
    #allocation5 [shape = 'u8[8192]{0}', space=vmem, size = 0x2000, scoped, tag = 'input window, operand 1, single buffered']
    #allocation6 [shape = 's32[1]{0}', space=sflag, size = 0x4, scoped, tag = 'scoped memory for tpu_custom_call.1']
    #allocation7 [shape = 'u8[4096]{0}', space=vmem, size = 0x1000, scoped, tag = 'output window, operand 0, single buffered']
    %7 = vsyncpa [#allocation3], 0
    %8 = vsyncpa [#allocation6], 0
    %9 = vsyncpa [#allocation4], 0
    // Predicated region
    $region2: #{tpu_custom_call.1} parent=1 // pred_check
      _
    $region3: #{tpu_custom_call.1} parent=1 // pred_check_branch
      %11 = sbr.rel (0) target = $region5
    $region4: #{tpu_custom_call.1} parent=1 // pred_region
      %s12 = sadd.s32 0, 0
      %s13 = smul.u32 2, %s12
      %15 = vsyncadd [#allocation3], 0
      %s16 = smul.addr %s13, 8
      %s17 = scalar_lea.hbm %s0, %s16
      %s18 = sshll.u32 %s17, 4
      %s19 = int_to_ptr.hbm [resolvable:$true] %s18
      %s20 = sshll.u32 [#allocation2], 4
      %s21 = int_to_ptr.vmem [resolvable:$true] %s20
      %26 = dma.hbm_to_vmem [thread:$0]  %s19, 256, %s21, [#allocation3], 128, 128, 8
    $region5: #{tpu_custom_call.1} parent=1 // pred_fallthru
      _
    // Predicated region
    $region6: #{tpu_custom_call.1} parent=1 // pred_check
      _
    $region7: #{tpu_custom_call.1} parent=1 // pred_check_branch
      %28 = sbr.rel (0) target = $region9
    $region8: #{tpu_custom_call.1} parent=1 // pred_region
      %s29 = sadd.s32 0, 0
      %s30 = smul.u32 2, %s29
      %32 = vsyncadd [#allocation6], 0
      %s33 = smul.addr %s30, 8
      %s34 = scalar_lea.hbm %s1, %s33
      %s35 = sshll.u32 %s34, 4
      %s36 = int_to_ptr.hbm [resolvable:$true] %s35
      %s37 = sshll.u32 [#allocation5], 4
      %s38 = int_to_ptr.vmem [resolvable:$true] %s37
      %43 = dma.hbm_to_vmem [thread:$0]  %s36, 256, %s38, [#allocation6], 128, 128, 8
    $region9: #{tpu_custom_call.1} parent=1 // pred_fallthru
      _
    // Predicated region
    $region10: #{tpu_custom_call.1} parent=1 // pred_check
      _
    $region11: #{tpu_custom_call.1} parent=1 // pred_check_branch
      %45 = sbr.rel (0) target = $region13
    $region12: #{tpu_custom_call.1} parent=1 // pred_region
      %47 = dma.done [#allocation3], 256
    $region13: #{tpu_custom_call.1} parent=1 // pred_fallthru
      _
    // Predicated region
    $region14: #{tpu_custom_call.1} parent=1 // pred_check
      _
    $region15: #{tpu_custom_call.1} parent=1 // pred_check_branch
      %49 = sbr.rel (0) target = $region17
    $region16: #{tpu_custom_call.1} parent=1 // pred_region
      %51 = dma.done [#allocation6], 256
    $region17: #{tpu_custom_call.1} parent=1 // pred_fallthru
      _
    %s52 = sadd.s32 0, 0
    %s53 = smul.u32 2, %s52
    %s54 = sadd.s32 0, 0
    %s55 = smul.u32 2, %s54
    %p56 = scmp.eq.s32.totalorder 0, 0
    // Predicated region
    $region18: #{tpu_custom_call.1} parent=1 // pred_check
      %p57 = pneg %p56
    $region19: #{tpu_custom_call.1} parent=1 // pred_check_branch
      %59 = sbr.rel (%p57) target = $region21
    $region20: #{tpu_custom_call.1} parent=1 // pred_region
      %60 = vst [vmem:[#allocation7] sm:$0xff] 0.0
    $region21: #{tpu_custom_call.1} parent=1 // pred_fallthru
      _
    %v61 = vld [vmem:[#allocation2] sm:$0xff]
    %v62 = vld [vmem:[#allocation2 + $0x8] sm:$0xff]
    %v63 = vld [vmem:[#allocation5] sm:$0xff]
    %v64 = vld [vmem:[#allocation5 + $0x8] sm:$0xff]
    %v65 = vsub.f32 %v61, %v63
    %v66 = vsub.f32 %v62, %v64
    %v67 = vand.u32 2147483647, %v65
    %v68 = vand.u32 2147483647, %v66
    %v69 = vld [vmem:[#allocation7] sm:$0xff]
    %v70 = vadd.f32 %v67, %v68
    %v71 = vadd.f32 %v69, %v70
    %72 = vst [vmem:[#allocation7] sm:$0xff] %v71
    // Predicated region
    $region22: #{tpu_custom_call.1} parent=1 // pred_check
      _
    $region23: #{tpu_custom_call.1} parent=1 // pred_check_branch
      %74 = sbr.rel (0) target = $region25
    $region24: #{tpu_custom_call.1} parent=1 // pred_region
      %76 = vsyncadd [#allocation4], 0
      %s78 = sshll.u32 [#allocation7], 4
      %s79 = int_to_ptr.vmem [resolvable:$true] %s78
      %s80 = sshll.u32 %s2, 4
      %s81 = int_to_ptr.hbm [resolvable:$true] %s80
      %83 = dma.vmem_to_hbm [thread:$0]  %s79, 128, %s81, [#allocation4]
    $region25: #{tpu_custom_call.1} parent=1 // pred_fallthru
      _
    // Predicated region
    $region26: #{tpu_custom_call.1} parent=1 // pred_check
      _
    $region27: #{tpu_custom_call.1} parent=1 // pred_check_branch
      %85 = sbr.rel (0) target = $region29
    $region28: #{tpu_custom_call.1} parent=1 // pred_region
      %87 = dma.done [#allocation4], 128
    $region29: #{tpu_custom_call.1} parent=1 // pred_fallthru
      _
    %88 = vsyncpa [#allocation3], 1
    %89 = vsyncpa [#allocation6], 1
    %90 = vsyncpa [#allocation4], 1

</llo_original>
